<compile_context>
chip_gen: v6e
topology: v6e:2x2x1
jax: 0.10.0
libtpu: 0.0.40
codegen_flags: <defaults>
</compile_context>

<pallas_src>
import jax
import jax.numpy as jnp
from jax.experimental import pallas as pl
from jax.experimental.pallas import tpu as pltpu


def _round_up(v, m):
    return ((v + m - 1) // m) * m


# ---------------------------------------------------------------------------
# Fused kernel: collapsed TCN == last-timestep MLP, batch packed along lanes
# ---------------------------------------------------------------------------

def _tcn_last_step_kernel(xt_ref, w_ref, b_ref, lw_ref, lb_ref, o_ref):
    """One grid step = TILE_N samples, processed end-to-end on-chip.

    xt_ref : (C_pad, TILE_N)          last input timestep, batch along lanes
    w_ref  : (n_layers, C_pad, C_pad) packed tap-0 conv weights (zero padded)
    b_ref  : (n_layers, C_pad, 1)     packed conv biases
    lw_ref : (O_pad, C_pad)           linear head weight (zero padded)
    lb_ref : (O_pad, 1)               linear head bias
    o_ref  : (O_pad, TILE_N)          lane-dense output slab
    """
    h = xt_ref[...]                                   # activations stay in vregs
    for k in range(w_ref.shape[0]):                   # unrolled over levels
        y = (jnp.dot(w_ref[k], h, preferred_element_type=jnp.float32)
             + b_ref[k])
        h = jnp.maximum(y, 0.0).astype(xt_ref.dtype)  # ReLU; Dropout == identity
    out = (jnp.dot(lw_ref[...], h, preferred_element_type=jnp.float32)
           + lb_ref[...])
    o_ref[...] = out.astype(o_ref.dtype)


# ---------------------------------------------------------------------------
# Wrapper: one pallas_call for the whole forward pass
# ---------------------------------------------------------------------------

def tcn_forward(x, params, *, tile_n=None, compute_dtype=jnp.float32):
    """x: (N, C_in, L) f32 -> (N, output_size) f32 (matches the PyTorch module)."""
    N, c0, L = x.shape
    n_layers, c_pad, _ = params["w0_pack"].shape
    o_pad = params["lin_w_pad"].shape[0]
    out_ch = params["lin_w"].shape[0]

    # Batch tiling: TILE_N is a multiple of 128 (lane-dense), capped at 512.
    n128 = _round_up(max(N, 1), 128)
    if tile_n is None:
        tile_n = min(512, n128)
    tile_n = _round_up(max(tile_n, 128), 128)
    n_pad = _round_up(N, tile_n)
    grid_n = n_pad // tile_n

    # Collapse: only x[:, :, -1] reaches the head (see header).  The transpose
    # and zero-pad below are layout plumbing so the kernel sees a lane-dense
    # (C_pad, N_pad) operand; all per-level compute stays inside the kernel.
    xt = jnp.transpose(x[:, :, L - 1])                             # (c0, N)
    xt = jnp.pad(xt, ((0, c_pad - c0), (0, n_pad - N))).astype(compute_dtype)

    w0 = params["w0_pack"].astype(compute_dtype)
    bp = params["b_pack"]                                          # f32 (accum)
    lw = params["lin_w_pad"].astype(compute_dtype)
    lb = params["lin_b_pad"]

    out_pad = pl.pallas_call(
        _tcn_last_step_kernel,
        out_shape=jax.ShapeDtypeStruct((o_pad, n_pad), jnp.float32),
        grid=(grid_n,),
        in_specs=[
            pl.BlockSpec((c_pad, tile_n), lambda n: (0, n)),
            pl.BlockSpec(w0.shape, lambda n: (0, 0, 0)),
            pl.BlockSpec(bp.shape, lambda n: (0, 0, 0)),
            pl.BlockSpec(lw.shape, lambda n: (0, 0)),
            pl.BlockSpec(lb.shape, lambda n: (0, 0)),
        ],
        out_specs=pl.BlockSpec((o_pad, tile_n), lambda n: (0, n)),
        compiler_params=pltpu.CompilerParams(
            dimension_semantics=("parallel",)),
    )(xt, w0, bp, lw, lb)

    return out_pad[:out_ch, :N].T        # single wrapper-side transpose -> (N, O)


# ---------------------------------------------------------------------------
# Deterministic parameter init (PyTorch-default-style uniform bounds).
# All kernel-side packing/padding is done HERE once (hoisted out of forward).
# ---------------------------------------------------------------------------

def init_tcn_params(key, input_size, output_size, num_channels, kernel_size=2):
    conv_w, conv_b, dilations = [], [], []
    in_ch = input_size
    for i, out_ch in enumerate(num_channels):
        key, kw, kb = jax.random.split(key, 3)
        bound = float(in_ch * kernel_size) ** -0.5
        w = jax.random.uniform(kw, (out_ch, in_ch, kernel_size),
                               minval=-bound, maxval=bound, dtype=jnp.float32)
        b = jax.random.uniform(kb, (out_ch,),
                               minval=-bound, maxval=bound, dtype=jnp.float32)
        conv_w.append(w)
        conv_b.append(b)
        dilations.append(2 ** i)
        in_ch = out_ch
    key, kw, kb = jax.random.split(key, 3)
    bound = float(num_channels[-1]) ** -0.5
    lin_w = jax.random.uniform(kw, (output_size, num_channels[-1]),
                               minval=-bound, maxval=bound, dtype=jnp.float32)
    lin_b = jax.random.uniform(kb, (output_size,),
                               minval=-bound, maxval=bound, dtype=jnp.float32)

    # One-time packing for the kernel: zero-padded tap-0 weights, biases, head.
    n_layers = len(num_channels)
    c_pad = _round_up(max([input_size] + list(num_channels)), 8)
    o_pad = _round_up(output_size, 8)
    w0_pack = jnp.zeros((n_layers, c_pad, c_pad), jnp.float32)
    b_pack = jnp.zeros((n_layers, c_pad, 1), jnp.float32)
    in_ch = input_size
    for i, out_ch in enumerate(num_channels):
        w0_pack = w0_pack.at[i, :out_ch, :in_ch].set(conv_w[i][:, :, 0])
        b_pack = b_pack.at[i, :out_ch, 0].set(conv_b[i])
        in_ch = out_ch
    lin_w_pad = jnp.zeros((o_pad, c_pad), jnp.float32)
    lin_w_pad = lin_w_pad.at[:output_size, :num_channels[-1]].set(lin_w)
    lin_b_pad = jnp.zeros((o_pad, 1), jnp.float32).at[:output_size, 0].set(lin_b)

    return {
        # raw module parameters (used by the full-sequence reference)
        "conv_w": conv_w, "conv_b": conv_b, "dilations": tuple(dilations),
        "kernel_size": kernel_size, "lin_w": lin_w, "lin_b": lin_b,
        # packed/padded parameters (used by the fused kernel)
        "w0_pack": w0_pack, "b_pack": b_pack,
        "lin_w_pad": lin_w_pad, "lin_b_pad": lin_b_pad,
    }


# ---------------------------------------------------------------------------
# Pure-JAX full-sequence reference (mirrors the PyTorch module tap-by-tap);
# guards the algebraic collapse used in the kernel.
# ---------------------------------------------------------------------------

def tcn_forward_ref(x, params):
    K = params["kernel_size"]
    h = x
    for w, b, d in zip(params["conv_w"], params["conv_b"], params["dilations"]):
        pad = (K - 1) * d
        l_out = h.shape[2] + pad            # = L + 2*pad - d*(K-1)
        hp = jnp.pad(h, ((0, 0), (0, 0), (pad, pad)))
        y = b[None, :, None]
        for j in range(K):
            y = y + jnp.einsum("oc,ncl->nol", w[:, :, j],
                               hp[:, :, j * d: j * d + l_out])
        h = jnp.maximum(y, 0.0)             # ReLU; Dropout == identity (eval)
    h_last = h[:, :, -1]
    return h_last @ params["lin_w"].T + params["lin_b"][None, :]


# ---------------------------------------------------------------------------

if __name__ == "__main__":
    key = jax.random.PRNGKey(0)

    # Small shapes consistent with the module's forward (Conv1d -> NCW input).
    batch, input_size, seq_len = 2, 4, 16
    num_channels = [8, 8]
    output_size = 4
    kernel_size = 2

    key, kx = jax.random.split(key)
    x = jax.random.normal(kx, (batch, input_size, seq_len), dtype=jnp.float32)

    params = init_tcn_params(key, input_size, output_size, num_channels,
                             kernel_size=kernel_size)

    out = jax.block_until_ready(tcn_forward(x, params))
    ref = tcn_forward_ref(x, params)

    assert out.shape == (batch, output_size), out.shape
    assert jnp.allclose(out, ref, atol=1e-5, rtol=1e-5), "mismatch vs reference"

    print("KERNEL_OK")
</pallas_src>

<mosaic_0001>
module attributes {stable_mosaic.version = 11 : i64} {
  func.func @_tcn_last_step_kernel(%arg0: i32, %arg1: memref<8x128xf32, #tpu.memory_space<vmem>>, %arg2: memref<2x8x8xf32, #tpu.memory_space<vmem>>, %arg3: memref<2x8x1xf32, #tpu.memory_space<vmem>>, %arg4: memref<8x8xf32, #tpu.memory_space<vmem>>, %arg5: memref<8x1xf32, #tpu.memory_space<vmem>>, %arg6: memref<8x128xf32, #tpu.memory_space<vmem>>) attributes {dimension_semantics = [#tpu.dimension_semantics<parallel>], iteration_bounds = array<i64: 1>, scalar_prefetch = 0 : i64, scratch_operands = 0 : i64, tpu.core_type = #tpu.core_type<tc>, window_params = [{transform_indices = @transform_0, window_bounds = array<i64: 8, 128>}, {pipeline_mode = #tpu.pipeline_mode<synchronous>, transform_indices = @transform_1, window_bounds = array<i64: 2, 8, 8>}, {pipeline_mode = #tpu.pipeline_mode<synchronous>, transform_indices = @transform_2, window_bounds = array<i64: 2, 8, 1>}, {pipeline_mode = #tpu.pipeline_mode<synchronous>, transform_indices = @transform_3, window_bounds = array<i64: 8, 8>}, {pipeline_mode = #tpu.pipeline_mode<synchronous>, transform_indices = @transform_4, window_bounds = array<i64: 8, 1>}, {transform_indices = @transform_5, window_bounds = array<i64: 8, 128>}]} {
    %c0 = arith.constant 0 : index
    %c0_0 = arith.constant 0 : index
    %0 = vector.load %arg1[%c0, %c0_0] : memref<8x128xf32, #tpu.memory_space<vmem>>, vector<8x128xf32>
    %c0_1 = arith.constant 0 : index
    %c0_2 = arith.constant 0 : index
    %c0_3 = arith.constant 0 : index
    %1 = vector.load %arg2[%c0_1, %c0_2, %c0_3] : memref<2x8x8xf32, #tpu.memory_space<vmem>>, vector<1x8x8xf32>
    %2 = vector.shape_cast %1 : vector<1x8x8xf32> to vector<8x8xf32>
    %cst = arith.constant dense<0.000000e+00> : vector<8x128xf32>
    %3 = tpu.matmul %2, %0, %cst {dimension_numbers = #tpu.dot_dimension_numbers<[1], [0], [0], [1], [0, 0, 1, 1], [], []>} : vector<8x8xf32>, vector<8x128xf32>, vector<8x128xf32> -> vector<8x128xf32>
    %c0_4 = arith.constant 0 : index
    %c0_5 = arith.constant 0 : index
    %c0_6 = arith.constant 0 : index
    %4 = vector.load %arg3[%c0_4, %c0_5, %c0_6] : memref<2x8x1xf32, #tpu.memory_space<vmem>>, vector<1x8x1xf32>
    %5 = vector.shape_cast %4 : vector<1x8x1xf32> to vector<8x1xf32>
    %6 = vector.broadcast %5 : vector<8x1xf32> to vector<8x128xf32>
    %7 = arith.addf %3, %6 : vector<8x128xf32>
    %cst_7 = arith.constant 0.000000e+00 : f32
    %8 = vector.broadcast %cst_7 : f32 to vector<8x128xf32>
    %9 = arith.maximumf %7, %8 : vector<8x128xf32>
    %c1 = arith.constant 1 : index
    %c0_8 = arith.constant 0 : index
    %c0_9 = arith.constant 0 : index
    %10 = vector.load %arg2[%c1, %c0_8, %c0_9] : memref<2x8x8xf32, #tpu.memory_space<vmem>>, vector<1x8x8xf32>
    %11 = vector.shape_cast %10 : vector<1x8x8xf32> to vector<8x8xf32>
    %cst_10 = arith.constant dense<0.000000e+00> : vector<8x128xf32>
    %12 = tpu.matmul %11, %9, %cst_10 {dimension_numbers = #tpu.dot_dimension_numbers<[1], [0], [0], [1], [0, 0, 1, 1], [], []>} : vector<8x8xf32>, vector<8x128xf32>, vector<8x128xf32> -> vector<8x128xf32>
    %c1_11 = arith.constant 1 : index
    %c0_12 = arith.constant 0 : index
    %c0_13 = arith.constant 0 : index
    %13 = vector.load %arg3[%c1_11, %c0_12, %c0_13] : memref<2x8x1xf32, #tpu.memory_space<vmem>>, vector<1x8x1xf32>
    %14 = vector.shape_cast %13 : vector<1x8x1xf32> to vector<8x1xf32>
    %15 = vector.broadcast %14 : vector<8x1xf32> to vector<8x128xf32>
    %16 = arith.addf %12, %15 : vector<8x128xf32>
    %cst_14 = arith.constant 0.000000e+00 : f32
    %17 = vector.broadcast %cst_14 : f32 to vector<8x128xf32>
    %18 = arith.maximumf %16, %17 : vector<8x128xf32>
    %c0_15 = arith.constant 0 : index
    %c0_16 = arith.constant 0 : index
    %19 = vector.load %arg4[%c0_15, %c0_16] : memref<8x8xf32, #tpu.memory_space<vmem>>, vector<8x8xf32>
    %cst_17 = arith.constant dense<0.000000e+00> : vector<8x128xf32>
    %20 = tpu.matmul %19, %18, %cst_17 {dimension_numbers = #tpu.dot_dimension_numbers<[1], [0], [0], [1], [0, 0, 1, 1], [], []>} : vector<8x8xf32>, vector<8x128xf32>, vector<8x128xf32> -> vector<8x128xf32>
    %c0_18 = arith.constant 0 : index
    %c0_19 = arith.constant 0 : index
    %21 = vector.load %arg5[%c0_18, %c0_19] : memref<8x1xf32, #tpu.memory_space<vmem>>, vector<8x1xf32>
    %22 = vector.broadcast %21 : vector<8x1xf32> to vector<8x128xf32>
    %23 = arith.addf %20, %22 : vector<8x128xf32>
    %c0_20 = arith.constant 0 : index
    %c0_21 = arith.constant 0 : index
    %24 = vector.load %arg6[%c0_20, %c0_21] : memref<8x128xf32, #tpu.memory_space<vmem>>, vector<8x128xf32>
    tpu.vector_store %arg6[%c0_20, %c0_21], %23 {strides = array<i32>} : memref<8x128xf32, #tpu.memory_space<vmem>>, vector<8x128xf32>,
    return
  }
  func.func @transform_0(%arg0: i32) -> (i32, i32) {
    %c0_i32 = arith.constant 0 : i32
    %c0_i32_0 = arith.constant 0 : i32
    return %c0_i32, %arg0 : i32, i32
  }
  func.func @transform_1(%arg0: i32) -> (i32, i32, i32) {
    %c0_i32 = arith.constant 0 : i32
    %c0_i32_0 = arith.constant 0 : i32
    %c0_i32_1 = arith.constant 0 : i32
    %c0_i32_2 = arith.constant 0 : i32
    return %c0_i32, %c0_i32_0, %c0_i32_1 : i32, i32, i32
  }
  func.func @transform_2(%arg0: i32) -> (i32, i32, i32) {
    %c0_i32 = arith.constant 0 : i32
    %c0_i32_0 = arith.constant 0 : i32
    %c0_i32_1 = arith.constant 0 : i32
    %c0_i32_2 = arith.constant 0 : i32
    return %c0_i32, %c0_i32_0, %c0_i32_1 : i32, i32, i32
  }
  func.func @transform_3(%arg0: i32) -> (i32, i32) {
    %c0_i32 = arith.constant 0 : i32
    %c0_i32_0 = arith.constant 0 : i32
    %c0_i32_1 = arith.constant 0 : i32
    return %c0_i32, %c0_i32_0 : i32, i32
  }
  func.func @transform_4(%arg0: i32) -> (i32, i32) {
    %c0_i32 = arith.constant 0 : i32
    %c0_i32_0 = arith.constant 0 : i32
    %c0_i32_1 = arith.constant 0 : i32
    return %c0_i32, %c0_i32_0 : i32, i32
  }
  func.func @transform_5(%arg0: i32) -> (i32, i32) {
    %c0_i32 = arith.constant 0 : i32
    %c0_i32_0 = arith.constant 0 : i32
    return %c0_i32, %arg0 : i32, i32
  }
}

</mosaic_0001>

<llo_original>
// kernel: tpu_custom_call.1
$region0: #{tpu_custom_call.1}
  #allocation0 [shape = 'u32[]', space=smem, size = 0x4, offset = 0x4, fixed_abs, tag = 'smem constant byte address 0x4 - core index']
  #allocation1 [shape = 'u32[144,128]{1,0:T(1,128)}', space=vmem, size = 0x12000, scoped, tag = 'internal scratch']
  %s0 = inlined_call_operand.vmem [shape: f32[8,128], index: 0, kind: input, shape index: {}]
  %s1 = inlined_call_operand.vmem [shape: f32[2,8,8], index: 1, kind: input, shape index: {}]
  %s2 = inlined_call_operand.vmem [shape: f32[2,8,1], index: 2, kind: input, shape index: {}]
  %s3 = inlined_call_operand.vmem [shape: f32[8,8], index: 3, kind: input, shape index: {}]
  %s4 = inlined_call_operand.vmem [shape: f32[8,1], index: 4, kind: input, shape index: {}]
  %s5 = inlined_call_operand.hbm [shape: f32[8,128], index: 5, kind: output, shape index: {}]
  %s6 = sld [smem:[#allocation0]]
  $region30: #{tpu_custom_call.1} parent=0
    _
  %s8 = ssub.s32 1, %s6
  %s9 = scalar_select 0, %s8, %s6
  $region1: #{tpu_custom_call.1} parent=0
    #allocation2 [shape = 'u8[4096]{0}', space=vmem, size = 0x1000, scoped, tag = 'output window, operand 0, single buffered']
    #allocation3 [shape = 's32[1]{0}', space=sflag, size = 0x4, scoped, tag = 'scoped memory for tpu_custom_call.1']
    %10 = vsyncpa [#allocation3], 0
    // Predicated region
    $region2: #{tpu_custom_call.1} parent=1 // pred_check
      _
    $region3: #{tpu_custom_call.1} parent=1 // pred_check_branch
      %12 = sbr.rel (0) target = $region5
    $region4: #{tpu_custom_call.1} parent=1 // pred_region
      _
    $region5: #{tpu_custom_call.1} parent=1 // pred_fallthru
      _
    // Predicated region
    $region6: #{tpu_custom_call.1} parent=1 // pred_check
      _
    $region7: #{tpu_custom_call.1} parent=1 // pred_check_branch
      %14 = sbr.rel (0) target = $region9
    $region8: #{tpu_custom_call.1} parent=1 // pred_region
      _
    $region9: #{tpu_custom_call.1} parent=1 // pred_fallthru
      _
    // Predicated region
    $region10: #{tpu_custom_call.1} parent=1 // pred_check
      _
    $region11: #{tpu_custom_call.1} parent=1 // pred_check_branch
      %16 = sbr.rel (0) target = $region13
    $region12: #{tpu_custom_call.1} parent=1 // pred_region
      _
    $region13: #{tpu_custom_call.1} parent=1 // pred_fallthru
      _
    // Predicated region
    $region14: #{tpu_custom_call.1} parent=1 // pred_check
      _
    $region15: #{tpu_custom_call.1} parent=1 // pred_check_branch
      %18 = sbr.rel (0) target = $region17
    $region16: #{tpu_custom_call.1} parent=1 // pred_region
      _
    $region17: #{tpu_custom_call.1} parent=1 // pred_fallthru
      _
    // Predicated region
    $region18: #{tpu_custom_call.1} parent=1 // pred_check
      _
    $region19: #{tpu_custom_call.1} parent=1 // pred_check_branch
      %20 = sbr.rel (0) target = $region21
    $region20: #{tpu_custom_call.1} parent=1 // pred_region
      _
    $region21: #{tpu_custom_call.1} parent=1 // pred_fallthru
      _
    %v21 = vld [vmem:[%s0] sm:$0xff]
    %v22 = vld [vmem:[%s1] sm:$0xff]
    %v23 = vld [vmem:[%s2] sm:$0xff]
    %25 = vset.pattern.permute.xlu0 0
    %26 = vperm.xlu0 %25, %v23
    %v27 = vpop.permute.xlu0 %26
    %vm29 = vcmask 64512
    %v31 = vsel %vm29, %v22, 0
    %33 = vmatprep.subr.mxu0 0.0
    %34 = vmatpush1.msra.mxu0 0.0
    %35 = vmatprep.subr.mxu0 0.0
    %36 = vmatpush1.msra.mxu0 0.0
    %37 = vmatprep.subr.mxu0 0.0
    %38 = vmatpush1.msra.mxu0 0.0
    %39 = vmatprep.subr.mxu0 0.0
    %40 = vmatpush1.msra.mxu0 0.0
    %41 = vmatprep.subr.mxu0 0.0
    %42 = vmatpush1.msra.mxu0 0.0
    %43 = vmatprep.subr.mxu0 0.0
    %44 = vmatpush1.msra.mxu0 0.0
    %45 = vmatprep.subr.mxu0 0.0
    %46 = vmatpush1.msra.mxu0 0.0
    %47 = vmatprep.subr.mxu0 0.0
    %48 = vmatpush1.msra.mxu0 0.0
    %49 = vmatprep.subr.mxu0 0.0
    %50 = vmatpush1.msra.mxu0 0.0
    %51 = vmatprep.subr.mxu0 0.0
    %52 = vmatpush1.msra.mxu0 0.0
    %53 = vmatprep.subr.mxu0 0.0
    %54 = vmatpush1.msra.mxu0 0.0
    %55 = vmatprep.subr.mxu0 0.0
    %56 = vmatpush1.msra.mxu0 0.0
    %57 = vmatprep.subr.mxu0 0.0
    %58 = vmatpush1.msra.mxu0 0.0
    %59 = vmatprep.subr.mxu0 0.0
    %60 = vmatpush1.msra.mxu0 0.0
    %61 = vmatprep.subr.mxu0 0.0
    %62 = vmatpush1.msra.mxu0 0.0
    %63 = vmatprep.subr.mxu0 0.0
    %64 = vmatpush1.msra.mxu0 %v21
    %65 = vmatprep.subr.mxu0 0.0
    %66 = vmatpush2.msra.mxu0 0.0
    %67 = vmatprep.subr.mxu0 0.0
    %68 = vmatpush2.msra.mxu0 0.0
    %69 = vmatprep.subr.mxu0 0.0
    %70 = vmatpush2.msra.mxu0 0.0
    %71 = vmatprep.subr.mxu0 0.0
    %72 = vmatpush2.msra.mxu0 0.0
    %73 = vmatprep.subr.mxu0 0.0
    %74 = vmatpush2.msra.mxu0 0.0
    %75 = vmatprep.subr.mxu0 0.0
    %76 = vmatpush2.msra.mxu0 0.0
    %77 = vmatprep.subr.mxu0 0.0
    %78 = vmatpush2.msra.mxu0 0.0
    %79 = vmatprep.subr.mxu0 0.0
    %80 = vmatpush2.msra.mxu0 0.0
    %81 = vmatprep.subr.mxu0 0.0
    %82 = vmatpush2.msra.mxu0 0.0
    %83 = vmatprep.subr.mxu0 0.0
    %84 = vmatpush2.msra.mxu0 0.0
    %85 = vmatprep.subr.mxu0 0.0
    %86 = vmatpush2.msra.mxu0 0.0
    %87 = vmatprep.subr.mxu0 0.0
    %88 = vmatpush2.msra.mxu0 0.0
    %89 = vmatprep.subr.mxu0 0.0
    %90 = vmatpush2.msra.mxu0 0.0
    %91 = vmatprep.subr.mxu0 0.0
    %92 = vmatpush2.msra.mxu0 0.0
    %93 = vmatprep.subr.mxu0 0.0
    %94 = vmatpush2.msra.mxu0 0.0
    %95 = vmatprep.subr.mxu0 0.0
    %96 = vmatpush2.msra.mxu0 0.0
    %97 = vmatprep.mubr.f32.mxu0 0.0
    %98 = vmatmul.mubr.f32.gmra.mxu0 %v31
    %v99 = vpop.f32.mrf.mxu0
    %v100 = vadd.f32 %v27, %v99
    %v101 = vpop.f32.mrf.mxu0
    %102 = vdwg.mxu0
    %v103 = vmax.f32 %v100, 0.0
    %s104 = scalar_lea.vmem %s1, 8
    %v105 = vld [vmem:[%s104] sm:$0xff]
    %s106 = scalar_lea.vmem %s2, 8
    %v107 = vld [vmem:[%s106] sm:$0xff]
    %109 = vset.pattern.permute.xlu0 0
    %110 = vperm.xlu0 %109, %v107
    %v111 = vpop.permute.xlu0 %110
    %v114 = vsel %vm29, %v105, 0
    %116 = vmatprep.subr.mxu0 0.0
    %117 = vmatpush1.msra.mxu0 0.0
    %118 = vmatprep.subr.mxu0 0.0
    %119 = vmatpush1.msra.mxu0 0.0
    %120 = vmatprep.subr.mxu0 0.0
    %121 = vmatpush1.msra.mxu0 0.0
    %122 = vmatprep.subr.mxu0 0.0
    %123 = vmatpush1.msra.mxu0 0.0
    %124 = vmatprep.subr.mxu0 0.0
    %125 = vmatpush1.msra.mxu0 0.0
    %126 = vmatprep.subr.mxu0 0.0
    %127 = vmatpush1.msra.mxu0 0.0
    %128 = vmatprep.subr.mxu0 0.0
    %129 = vmatpush1.msra.mxu0 0.0
    %130 = vmatprep.subr.mxu0 0.0
    %131 = vmatpush1.msra.mxu0 0.0
    %132 = vmatprep.subr.mxu0 0.0
    %133 = vmatpush1.msra.mxu0 0.0
    %134 = vmatprep.subr.mxu0 0.0
    %135 = vmatpush1.msra.mxu0 0.0
    %136 = vmatprep.subr.mxu0 0.0
    %137 = vmatpush1.msra.mxu0 0.0
    %138 = vmatprep.subr.mxu0 0.0
    %139 = vmatpush1.msra.mxu0 0.0
    %140 = vmatprep.subr.mxu0 0.0
    %141 = vmatpush1.msra.mxu0 0.0
    %142 = vmatprep.subr.mxu0 0.0
    %143 = vmatpush1.msra.mxu0 0.0
    %144 = vmatprep.subr.mxu0 0.0
    %145 = vmatpush1.msra.mxu0 0.0
    %146 = vmatprep.subr.mxu0 0.0
    %147 = vmatpush1.msra.mxu0 %v103
    %148 = vmatprep.subr.mxu0 0.0
    %149 = vmatpush2.msra.mxu0 0.0
    %150 = vmatprep.subr.mxu0 0.0
    %151 = vmatpush2.msra.mxu0 0.0
    %152 = vmatprep.subr.mxu0 0.0
    %153 = vmatpush2.msra.mxu0 0.0
    %154 = vmatprep.subr.mxu0 0.0
    %155 = vmatpush2.msra.mxu0 0.0
    %156 = vmatprep.subr.mxu0 0.0
    %157 = vmatpush2.msra.mxu0 0.0
    %158 = vmatprep.subr.mxu0 0.0
    %159 = vmatpush2.msra.mxu0 0.0
    %160 = vmatprep.subr.mxu0 0.0
    %161 = vmatpush2.msra.mxu0 0.0
    %162 = vmatprep.subr.mxu0 0.0
    %163 = vmatpush2.msra.mxu0 0.0
    %164 = vmatprep.subr.mxu0 0.0
    %165 = vmatpush2.msra.mxu0 0.0
    %166 = vmatprep.subr.mxu0 0.0
    %167 = vmatpush2.msra.mxu0 0.0
    %168 = vmatprep.subr.mxu0 0.0
    %169 = vmatpush2.msra.mxu0 0.0
    %170 = vmatprep.subr.mxu0 0.0
    %171 = vmatpush2.msra.mxu0 0.0
    %172 = vmatprep.subr.mxu0 0.0
    %173 = vmatpush2.msra.mxu0 0.0
    %174 = vmatprep.subr.mxu0 0.0
    %175 = vmatpush2.msra.mxu0 0.0
    %176 = vmatprep.subr.mxu0 0.0
    %177 = vmatpush2.msra.mxu0 0.0
    %178 = vmatprep.subr.mxu0 0.0
    %179 = vmatpush2.msra.mxu0 0.0
    %180 = vmatprep.mubr.f32.mxu0 0.0
    %181 = vmatmul.mubr.f32.gmra.mxu0 %v114
    %v182 = vpop.f32.mrf.mxu0
    %v183 = vadd.f32 %v111, %v182
    %v184 = vpop.f32.mrf.mxu0
    %185 = vdwg.mxu0
    %v186 = vmax.f32 %v183, 0.0
    %v187 = vld [vmem:[%s3] sm:$0xff]
    %v188 = vld [vmem:[%s4] sm:$0xff]
    %190 = vset.pattern.permute.xlu0 0
    %191 = vperm.xlu0 %190, %v188
    %v192 = vpop.permute.xlu0 %191
    %v195 = vsel %vm29, %v187, 0
    %197 = vmatprep.subr.mxu0 0.0
    %198 = vmatpush1.msra.mxu0 0.0
    %199 = vmatprep.subr.mxu0 0.0
    %200 = vmatpush1.msra.mxu0 0.0
    %201 = vmatprep.subr.mxu0 0.0
    %202 = vmatpush1.msra.mxu0 0.0
    %203 = vmatprep.subr.mxu0 0.0
    %204 = vmatpush1.msra.mxu0 0.0
    %205 = vmatprep.subr.mxu0 0.0
    %206 = vmatpush1.msra.mxu0 0.0
    %207 = vmatprep.subr.mxu0 0.0
    %208 = vmatpush1.msra.mxu0 0.0
    %209 = vmatprep.subr.mxu0 0.0
    %210 = vmatpush1.msra.mxu0 0.0
    %211 = vmatprep.subr.mxu0 0.0
    %212 = vmatpush1.msra.mxu0 0.0
    %213 = vmatprep.subr.mxu0 0.0
    %214 = vmatpush1.msra.mxu0 0.0
    %215 = vmatprep.subr.mxu0 0.0
    %216 = vmatpush1.msra.mxu0 0.0
    %217 = vmatprep.subr.mxu0 0.0
    %218 = vmatpush1.msra.mxu0 0.0
    %219 = vmatprep.subr.mxu0 0.0
    %220 = vmatpush1.msra.mxu0 0.0
    %221 = vmatprep.subr.mxu0 0.0
    %222 = vmatpush1.msra.mxu0 0.0
    %223 = vmatprep.subr.mxu0 0.0
    %224 = vmatpush1.msra.mxu0 0.0
    %225 = vmatprep.subr.mxu0 0.0
    %226 = vmatpush1.msra.mxu0 0.0
    %227 = vmatprep.subr.mxu0 0.0
    %228 = vmatpush1.msra.mxu0 %v186
    %229 = vmatprep.subr.mxu0 0.0
    %230 = vmatpush2.msra.mxu0 0.0
    %231 = vmatprep.subr.mxu0 0.0
    %232 = vmatpush2.msra.mxu0 0.0
    %233 = vmatprep.subr.mxu0 0.0
    %234 = vmatpush2.msra.mxu0 0.0
    %235 = vmatprep.subr.mxu0 0.0
    %236 = vmatpush2.msra.mxu0 0.0
    %237 = vmatprep.subr.mxu0 0.0
    %238 = vmatpush2.msra.mxu0 0.0
    %239 = vmatprep.subr.mxu0 0.0
    %240 = vmatpush2.msra.mxu0 0.0
    %241 = vmatprep.subr.mxu0 0.0
    %242 = vmatpush2.msra.mxu0 0.0
    %243 = vmatprep.subr.mxu0 0.0
    %244 = vmatpush2.msra.mxu0 0.0
    %245 = vmatprep.subr.mxu0 0.0
    %246 = vmatpush2.msra.mxu0 0.0
    %247 = vmatprep.subr.mxu0 0.0
    %248 = vmatpush2.msra.mxu0 0.0
    %249 = vmatprep.subr.mxu0 0.0
    %250 = vmatpush2.msra.mxu0 0.0
    %251 = vmatprep.subr.mxu0 0.0
    %252 = vmatpush2.msra.mxu0 0.0
    %253 = vmatprep.subr.mxu0 0.0
    %254 = vmatpush2.msra.mxu0 0.0
    %255 = vmatprep.subr.mxu0 0.0
    %256 = vmatpush2.msra.mxu0 0.0
    %257 = vmatprep.subr.mxu0 0.0
    %258 = vmatpush2.msra.mxu0 0.0
    %259 = vmatprep.subr.mxu0 0.0
    %260 = vmatpush2.msra.mxu0 0.0
    %261 = vmatprep.mubr.f32.mxu0 0.0
    %262 = vmatmul.mubr.f32.gmra.mxu0 %v195
    %v263 = vpop.f32.mrf.mxu0
    %v264 = vadd.f32 %v192, %v263
    %v265 = vpop.f32.mrf.mxu0
    %266 = vdwg.mxu0
    %267 = vst [vmem:[#allocation2] sm:$0xff] %v264
    // Predicated region
    $region22: #{tpu_custom_call.1} parent=1 // pred_check
      _
    $region23: #{tpu_custom_call.1} parent=1 // pred_check_branch
      %269 = sbr.rel (0) target = $region25
    $region24: #{tpu_custom_call.1} parent=1 // pred_region
      %s271 = ssub.s32 128, 128
      %272 = vsyncadd [#allocation3], %s271
      %s274 = sshll.u32 [#allocation2], 4
      %s275 = int_to_ptr.vmem [resolvable:$true] %s274
      %277 = dma.vmem_to_hbm [thread:$0]  %s275, 128, %s5, [#allocation3]
    $region25: #{tpu_custom_call.1} parent=1 // pred_fallthru
      _
    // Predicated region
    $region26: #{tpu_custom_call.1} parent=1 // pred_check
      _
    $region27: #{tpu_custom_call.1} parent=1 // pred_check_branch
      %279 = sbr.rel (0) target = $region29
    $region28: #{tpu_custom_call.1} parent=1 // pred_region
      %280 = dma.done [#allocation3], 128
    $region29: #{tpu_custom_call.1} parent=1 // pred_fallthru
      _
    %281 = vsyncpa [#allocation3], 1

</llo_original>
